<compile_context>
chip_gen: v5e
topology: v5e:2x2
jax: 0.10.0
libtpu: 0.0.40
codegen_flags: <defaults>
</compile_context>

<pallas_src>
import jax
import jax.numpy as jnp
from jax.experimental import pallas as pl
from jax.experimental.pallas import tpu as pltpu


def _make_kernel(*, H, t_h, W, p_h, n_c, mask_h):
    def kernel(x_ref, t_ref, cam_ref, out_ref):
        # x_ref, t_ref : (1, t_c, t_h, W)  features, native dtype
        # cam_ref      : (1, 1,  t_h, W)   cam map, native dtype
        # out_ref      : (1, 1,  p_h, W)   f32 partial, resident across the channel axis
        if n_c > 1:
            @pl.when(pl.program_id(2) == 0)
            def _():
                out_ref[...] = jnp.zeros_like(out_ref)

        x = x_ref[...].astype(jnp.float32)
        t = t_ref[...].astype(jnp.float32)
        d = x - t
        # Channel reduction first: whole-vreg VPU adds over the leading (tile) dims.
        s = jnp.sum(d * d, axis=(0, 1))                         # (t_h, W)
        # Weight computed in-kernel from the native-dtype cam block.
        w = (cam_ref[0, 0].astype(jnp.float32) + 1.0) * 0.5     # (t_h, W)
        v = s * w

        if mask_h:
            # Last spatial tile can read past H; garbage rows may be inf/NaN,
            # so mask the value (a select discards NaNs), not just the weight.
            rows = jax.lax.broadcasted_iota(jnp.int32, (t_h, W), 0)
            v = jnp.where(rows < (H - pl.program_id(1) * t_h), v, 0.0)

        if p_h != t_h:
            # t_h % 8 == 0 here: vreg-aligned (free) reshape, then pure VPU adds.
            v = v.reshape(t_h // p_h, p_h, W).sum(axis=0)        # (p_h, W)

        if n_c > 1:
            out_ref[...] += v[None, None]
        else:
            out_ref[...] = v[None, None]

    return kernel


def mse_loss_with_precomputed_cam_map_single(input_features, cam_map, target_features,
                                             *, block_elems=1 << 20):
    """JAX/Pallas equivalent of MSELossWithPrecomputedCAMMapSingle().forward(
        (input_features, cam_map), target_features) with default ctor args.

    input_features, target_features : (B, C, H, W)
    cam_map                         : (B, 1, H, W)
    returns                         : scalar (float32; low-precision inputs are
                                      upcast to f32 in VMEM, slightly more accurate
                                      than PyTorch's native half-precision path)
    block_elems : target number of feature elements per block (~4 MiB once in f32).
    """
    B, C, H, W = input_features.shape
    assert target_features.shape == (B, C, H, W)
    assert cam_map.shape == (B, 1, H, W)

    itemsize = jnp.dtype(input_features.dtype).itemsize
    # Sublane granularity for the feature dtype (f32: 8, bf16/f16: 16, int8/fp8: 32).
    sub = max(8, 32 // itemsize)

    # --- tile sizing (static, trace time) -----------------------------------
    rows_ideal = max(1, block_elems // max(1, C * W))
    if rows_ideal >= H:
        # Whole (C, H, W) slab per batch fits the target: no spatial tiling.
        t_c, t_h = C, H
    elif rows_ideal >= sub:
        # Spatial tiling only; keep all channels per block.
        t_c, t_h = C, (rows_ideal // sub) * sub
    else:
        # Channel tiling (large C / large spatial rows): minimum legal row tile,
        # and t_c = largest divisor of C under the target (so no channel mask).
        t_h = H if H < sub else sub
        c_ideal = max(1, block_elems // max(1, t_h * W))
        t_c = 1
        for cand in range(1, C + 1):
            if C % cand == 0 and cand <= c_ideal:
                t_c = cand

    n_h = pl.cdiv(H, t_h)
    n_c = C // t_c                       # exact: t_c divides C by construction
    mask_h = (H % t_h) != 0
    p_h = 8 if (t_h % 8 == 0) else t_h   # fold partial to 8 sublanes when aligned

    kernel = _make_kernel(H=H, t_h=t_h, W=W, p_h=p_h, n_c=n_c, mask_h=mask_h)

    partials = pl.pallas_call(
        kernel,
        out_shape=jax.ShapeDtypeStruct((B, n_h, p_h, W), jnp.float32),
        grid_spec=pltpu.PrefetchScalarGridSpec(
            num_scalar_prefetch=0,
            # Channel (reduction/accumulation) axis last.
            grid=(B, n_h, n_c),
            in_specs=[
                pl.BlockSpec((1, t_c, t_h, W), lambda b, s, c: (b, c, s, 0)),
                pl.BlockSpec((1, t_c, t_h, W), lambda b, s, c: (b, c, s, 0)),
                # cam index ignores c -> fetched once per (b, s), reused across c.
                pl.BlockSpec((1, 1, t_h, W), lambda b, s, c: (b, 0, s, 0)),
            ],
            # Output slot per (b, s); resident (accumulated) across the c axis.
            out_specs=pl.BlockSpec((1, 1, p_h, W), lambda b, s, c: (b, s, 0, 0)),
        ),
        compiler_params=pltpu.CompilerParams(
            dimension_semantics=("parallel", "parallel", "arbitrary"),
            # Covers 2 inputs x 2 pipeline buffers x ~4 MiB blocks plus f32
            # intermediates; also lifts v5e's 16 MiB scoped default. Fits v7x's
            # 64 MiB physical VMEM with headroom.
            vmem_limit_bytes=40 * 1024 * 1024,
        ),
    )(input_features, target_features, cam_map)

    # Tiny epilogue over the per-tile partials.  Kept out-of-kernel so every grid
    # step stays independent (helps v7x dual-TC sharding); for latency-critical
    # tiny workloads the spatial axis could also be accumulated in-kernel.
    return jnp.sum(partials)


def _reference(input_features, cam_map, target_features):
    d = (input_features.astype(jnp.float32) - target_features.astype(jnp.float32)) ** 2
    cam = jnp.broadcast_to(cam_map.astype(jnp.float32), d.shape)
    return jnp.sum((d + d * cam) / 2.0)


if __name__ == "__main__":
    key = jax.random.PRNGKey(0)

    def _check(B, C, H, W, block_elems):
        k = jax.random.fold_in(key, B * 1000 + C * 100 + H)
        k1, k2, k3 = jax.random.split(k, 3)
        x = jax.random.normal(k1, (B, C, H, W), dtype=jnp.float32)
        t = jax.random.normal(k2, (B, C, H, W), dtype=jnp.float32)
        cam = jax.random.uniform(k3, (B, 1, H, W), dtype=jnp.float32)
        out = mse_loss_with_precomputed_cam_map_single(x, cam, t, block_elems=block_elems)
        out = jax.block_until_ready(out)
        ref = _reference(x, cam, t)
        assert jnp.allclose(out, ref, rtol=1e-5, atol=1e-4), (out, ref)

    # Small shape consistent with the module (default block sizing: single block).
    _check(2, 4, 16, 16, 1 << 20)
    # Force spatial tiling + ragged-H masking at small shapes.
    _check(2, 6, 20, 24, 2048)
    # Force channel tiling (accumulating grid axis) + masking at small shapes.
    _check(2, 6, 20, 24, 256)

    print("KERNEL_OK")
</pallas_src>

<mosaic_0001>
module attributes {stable_mosaic.version = 11 : i64} {
  func.func @kernel(%arg0: i32, %arg1: i32, %arg2: i32, %arg3: memref<1x4x16x16xf32, #tpu.memory_space<vmem>>, %arg4: memref<1x4x16x16xf32, #tpu.memory_space<vmem>>, %arg5: memref<1x1x16x16xf32, #tpu.memory_space<vmem>>, %arg6: memref<1x1x8x16xf32, #tpu.memory_space<vmem>>) attributes {dimension_semantics = [#tpu.dimension_semantics<parallel>, #tpu.dimension_semantics<parallel>, #tpu.dimension_semantics<arbitrary>], iteration_bounds = array<i64: 2, 1, 1>, scalar_prefetch = 0 : i64, scratch_operands = 0 : i64, tpu.core_type = #tpu.core_type<tc>, window_params = [{transform_indices = @transform_0, window_bounds = array<i64: 1, 4, 16, 16>}, {transform_indices = @transform_1, window_bounds = array<i64: 1, 4, 16, 16>}, {transform_indices = @transform_2, window_bounds = array<i64: 1, 1, 16, 16>}, {transform_indices = @transform_3, window_bounds = array<i64: 1, 1, 8, 16>}]} {
    %c0 = arith.constant 0 : index
    %c0_0 = arith.constant 0 : index
    %c0_1 = arith.constant 0 : index
    %c0_2 = arith.constant 0 : index
    %0 = vector.load %arg3[%c0, %c0_0, %c0_1, %c0_2] : memref<1x4x16x16xf32, #tpu.memory_space<vmem>>, vector<1x4x16x16xf32>
    %c0_3 = arith.constant 0 : index
    %c0_4 = arith.constant 0 : index
    %c0_5 = arith.constant 0 : index
    %c0_6 = arith.constant 0 : index
    %1 = vector.load %arg4[%c0_3, %c0_4, %c0_5, %c0_6] : memref<1x4x16x16xf32, #tpu.memory_space<vmem>>, vector<1x4x16x16xf32>
    %2 = arith.subf %0, %1 : vector<1x4x16x16xf32>
    %3 = arith.mulf %2, %2 : vector<1x4x16x16xf32>
    %cst = arith.constant dense<0.000000e+00> : vector<16x16xf32>
    %4 = vector.multi_reduction <add>, %3, %cst [0, 1] : vector<1x4x16x16xf32> to vector<16x16xf32>
    %c0_7 = arith.constant 0 : index
    %c0_8 = arith.constant 0 : index
    %c0_9 = arith.constant 0 : index
    %c0_10 = arith.constant 0 : index
    %5 = vector.load %arg5[%c0_7, %c0_8, %c0_9, %c0_10] : memref<1x1x16x16xf32, #tpu.memory_space<vmem>>, vector<1x1x16x16xf32>
    %6 = vector.shape_cast %5 : vector<1x1x16x16xf32> to vector<16x16xf32>
    %cst_11 = arith.constant 1.000000e+00 : f32
    %7 = vector.broadcast %cst_11 : f32 to vector<16x16xf32>
    %8 = arith.addf %6, %7 : vector<16x16xf32>
    %cst_12 = arith.constant 5.000000e-01 : f32
    %9 = vector.broadcast %cst_12 : f32 to vector<16x16xf32>
    %10 = arith.mulf %8, %9 : vector<16x16xf32>
    %11 = arith.mulf %4, %10 : vector<16x16xf32>
    %12 = vector.shape_cast %11 : vector<16x16xf32> to vector<2x8x16xf32>
    %cst_13 = arith.constant dense<0.000000e+00> : vector<8x16xf32>
    %13 = vector.multi_reduction <add>, %12, %cst_13 [0] : vector<2x8x16xf32> to vector<8x16xf32>
    %14 = vector.shape_cast %13 : vector<8x16xf32> to vector<1x1x8x16xf32>
    %c0_14 = arith.constant 0 : index
    %c0_15 = arith.constant 0 : index
    %c0_16 = arith.constant 0 : index
    %c0_17 = arith.constant 0 : index
    %15 = vector.load %arg6[%c0_14, %c0_15, %c0_16, %c0_17] : memref<1x1x8x16xf32, #tpu.memory_space<vmem>>, vector<1x1x8x16xf32>
    tpu.vector_store %arg6[%c0_14, %c0_15, %c0_16, %c0_17], %14 {strides = array<i32>} : memref<1x1x8x16xf32, #tpu.memory_space<vmem>>, vector<1x1x8x16xf32>,
    return
  }
  func.func @transform_0(%arg0: i32, %arg1: i32, %arg2: i32) -> (i32, i32, i32, i32) {
    %c0_i32 = arith.constant 0 : i32
    %c0_i32_0 = arith.constant 0 : i32
    return %arg0, %arg2, %arg1, %c0_i32 : i32, i32, i32, i32
  }
  func.func @transform_1(%arg0: i32, %arg1: i32, %arg2: i32) -> (i32, i32, i32, i32) {
    %c0_i32 = arith.constant 0 : i32
    %c0_i32_0 = arith.constant 0 : i32
    return %arg0, %arg2, %arg1, %c0_i32 : i32, i32, i32, i32
  }
  func.func @transform_2(%arg0: i32, %arg1: i32, %arg2: i32) -> (i32, i32, i32, i32) {
    %c0_i32 = arith.constant 0 : i32
    %c0_i32_0 = arith.constant 0 : i32
    %c0_i32_1 = arith.constant 0 : i32
    return %arg0, %c0_i32, %arg1, %c0_i32_0 : i32, i32, i32, i32
  }
  func.func @transform_3(%arg0: i32, %arg1: i32, %arg2: i32) -> (i32, i32, i32, i32) {
    %c0_i32 = arith.constant 0 : i32
    %c0_i32_0 = arith.constant 0 : i32
    %c0_i32_1 = arith.constant 0 : i32
    return %arg0, %arg1, %c0_i32, %c0_i32_0 : i32, i32, i32, i32
  }
}

</mosaic_0001>

<llo_original>
// kernel: tpu_custom_call.1
$region0: #{tpu_custom_call.1}
  #allocation0 [shape = 'u32[]', space=smem, size = 0x4, offset = 0x4, fixed_abs, tag = 'smem constant byte address 0x4 - core index']
  #allocation1 [shape = 'u32[72,128]{1,0:T(1,128)}', space=vmem, size = 0x9000, scoped, tag = 'internal scratch']
  %s0 = inlined_call_operand.hbm [shape: f32[2,4,16,16], index: 0, kind: input, shape index: {}]
  %s1 = inlined_call_operand.hbm [shape: f32[2,4,16,16], index: 1, kind: input, shape index: {}]
  %s2 = inlined_call_operand.hbm [shape: f32[2,1,16,16], index: 2, kind: input, shape index: {}]
  %s3 = inlined_call_operand.hbm [shape: f32[2,1,8,16], index: 3, kind: output, shape index: {}]
  %s4 = sld [smem:[#allocation0]]
  $region57: #{tpu_custom_call.1} parent=0
    _
  %s6 = ssub.s32 1, %s4
  %s7 = scalar_select 0, %s6, %s4
  $region1: #{tpu_custom_call.1} parent=0
    #allocation2 [shape = 'u8[65536]{0}', space=vmem, size = 0x10000, scoped, tag = 'input window, operand 0']
    #allocation3 [shape = 's32[2]{0}', space=sflag, size = 0x8, scoped, tag = 'scoped memory for tpu_custom_call.1']
    #allocation4 [shape = 's32[2]{0}', space=sflag, size = 0x8, scoped, tag = 'scoped memory for tpu_custom_call.1']
    #allocation5 [shape = 'u8[65536]{0}', space=vmem, size = 0x10000, scoped, tag = 'input window, operand 1']
    #allocation6 [shape = 's32[2]{0}', space=sflag, size = 0x8, scoped, tag = 'scoped memory for tpu_custom_call.1']
    #allocation7 [shape = 'u8[16384]{0}', space=vmem, size = 0x4000, scoped, tag = 'input window, operand 2']
    #allocation8 [shape = 'u8[8192]{0}', space=vmem, size = 0x2000, scoped, tag = 'output window, operand 0']
    %8 = vsyncpa [#allocation3], 0
    %s9 = scalar_lea.sflag [#allocation3], 1
    %10 = vsyncpa %s9, 0
    %11 = vsyncpa [#allocation6], 0
    %s12 = scalar_lea.sflag [#allocation6], 1
    %13 = vsyncpa %s12, 0
    %14 = vsyncpa [#allocation4], 0
    %s15 = scalar_lea.sflag [#allocation4], 1
    %16 = vsyncpa %s15, 0
    loop: start=0, step=1, limit=4
    $region2: #{tpu_custom_call.1} parent=1 // loop_pre_header
      _
    $region3: #{tpu_custom_call.1} parent=1 // loop_header
      %s18 = sphi 0, %s22
      %p19 = scmp.ge.s32.totalorder %s18, 4
      %s25 = sphi 0, %s44
      %s26 = sphi 0, %s40
      %s27 = sphi 0, %s36
      %s28 = sphi 0, %s25
      %s29 = sphi 0, %s26
      %s30 = sphi 0, %s27
      %s31 = sphi 0, %s28
      %s32 = sphi 0, %s29
      %s33 = sphi 0, %s30
      %s51 = sphi 0, %s53
      %s54 = sphi 0, %s51
      %s55 = sphi 0, %s54
      %s71 = sphi 0, %s55
      %s81 = sphi 0, %s83
      %s84 = sphi 0, %s81
      %s85 = sphi 0, %s84
      %s101 = sphi 0, %s85
      %s109 = sphi 0, %s111
      %s112 = sphi 0, %s109
      %s113 = sphi 0, %s112
      %s129 = sphi 0, %s113
      %s137 = sphi 0, %s139
      %s140 = sphi 0, %s137
      %s141 = sphi 0, %s140
      %s157 = sphi 0, %s141
    $region4: #{tpu_custom_call.1} parent=1 // loop_header_branch
      %21 = sbr.rel (%p19) target = $region8
    $region5: #{tpu_custom_call.1} parent=1 // loop_body
      %s23 = ssub.s32 %s18, 1
      %s24 = ssub.s32 %s18, 2
      %s34 = sadd.s32 1, %s27
      %p35 = scmp.ge.s32.totalorder %s34, 1
      %s36 = scalar_select %p35, 0, %s34
      %s37 = sadd.s32 1, %s26
      %s38 = scalar_select %p35, %s37, %s26
      %p39 = scmp.ge.s32.totalorder %s38, 1
      %s40 = scalar_select %p39, 0, %s38
      %s41 = sadd.s32 1, %s25
      %s42 = scalar_select %p39, %s41, %s25
      %p43 = scmp.ge.s32.totalorder %s42, 2
      %s44 = scalar_select %p43, 0, %s42
      %s45 = ssub.s32 %s25, %s44
      %s46 = ssub.s32 %s27, %s36
      %s47 = sor.u32 %s45, %s46
      %s48 = ssub.s32 %s26, %s40
      %s49 = sor.u32 %s47, %s48
      %p50 = scmp.eq.s32.totalorder %s49, 0
      %s52 = sadd.s32 %s51, 1
      %s53 = scalar_select %p50, %s51, %s52
      %p56 = pneg %p50
      %p57 = scmp.eq.s32.totalorder %s18, 1
      %p58 = por %p56, %p57
      %p59 = scmp.ne.s32.totalorder %s51, %s54
      %p60 = scmp.eq.s32.totalorder %s18, 0
      %p61 = por %p59, %p60
      %p62 = scmp.ne.s32.totalorder %s51, %s54
      %p63 = scmp.eq.s32.totalorder %s23, 1
      %p64 = por %p62, %p63
      %p65 = scmp.ne.s32.totalorder %s54, %s55
      %p66 = scmp.eq.s32.totalorder %s23, 0
      %p67 = por %p65, %p66
      %p68 = scmp.ne.s32.totalorder %s54, %s55
      %p69 = scmp.eq.s32.totalorder %s24, 1
      %p70 = por %p68, %p69
      %p72 = scmp.ne.s32.totalorder %s55, %s71
      %p73 = scmp.eq.s32.totalorder %s24, 0
      %p74 = por %p72, %p73
      %s75 = ssub.s32 %s25, %s44
      %s76 = ssub.s32 %s27, %s36
      %s77 = sor.u32 %s75, %s76
      %s78 = ssub.s32 %s26, %s40
      %s79 = sor.u32 %s77, %s78
      %p80 = scmp.eq.s32.totalorder %s79, 0
      %s82 = sadd.s32 %s81, 1
      %s83 = scalar_select %p80, %s81, %s82
      %p86 = pneg %p80
      %p87 = scmp.eq.s32.totalorder %s18, 1
      %p88 = por %p86, %p87
      %p89 = scmp.ne.s32.totalorder %s81, %s84
      %p90 = scmp.eq.s32.totalorder %s18, 0
      %p91 = por %p89, %p90
      %p92 = scmp.ne.s32.totalorder %s81, %s84
      %p93 = scmp.eq.s32.totalorder %s23, 1
      %p94 = por %p92, %p93
      %p95 = scmp.ne.s32.totalorder %s84, %s85
      %p96 = scmp.eq.s32.totalorder %s23, 0
      %p97 = por %p95, %p96
      %p98 = scmp.ne.s32.totalorder %s84, %s85
      %p99 = scmp.eq.s32.totalorder %s24, 1
      %p100 = por %p98, %p99
      %p102 = scmp.ne.s32.totalorder %s85, %s101
      %p103 = scmp.eq.s32.totalorder %s24, 0
      %p104 = por %p102, %p103
      %s105 = ssub.s32 %s25, %s44
      %s106 = ssub.s32 %s26, %s40
      %s107 = sor.u32 %s105, %s106
      %p108 = scmp.eq.s32.totalorder %s107, 0
      %s110 = sadd.s32 %s109, 1
      %s111 = scalar_select %p108, %s109, %s110
      %p114 = pneg %p108
      %p115 = scmp.eq.s32.totalorder %s18, 1
      %p116 = por %p114, %p115
      %p117 = scmp.ne.s32.totalorder %s109, %s112
      %p118 = scmp.eq.s32.totalorder %s18, 0
      %p119 = por %p117, %p118
      %p120 = scmp.ne.s32.totalorder %s109, %s112
      %p121 = scmp.eq.s32.totalorder %s23, 1
      %p122 = por %p120, %p121
      %p123 = scmp.ne.s32.totalorder %s112, %s113
      %p124 = scmp.eq.s32.totalorder %s23, 0
      %p125 = por %p123, %p124
      %p126 = scmp.ne.s32.totalorder %s112, %s113
      %p127 = scmp.eq.s32.totalorder %s24, 1
      %p128 = por %p126, %p127
      %p130 = scmp.ne.s32.totalorder %s113, %s129
      %p131 = scmp.eq.s32.totalorder %s24, 0
      %p132 = por %p130, %p131
      %s133 = ssub.s32 %s25, %s44
      %s134 = ssub.s32 %s26, %s40
      %s135 = sor.u32 %s133, %s134
      %p136 = scmp.eq.s32.totalorder %s135, 0
      %s138 = sadd.s32 %s137, 1
      %s139 = scalar_select %p136, %s137, %s138
      %p142 = pneg %p136
      %p143 = scmp.eq.s32.totalorder %s18, 1
      %p144 = por %p142, %p143
      %p145 = scmp.ne.s32.totalorder %s137, %s140
      %p146 = scmp.eq.s32.totalorder %s18, 0
      %p147 = por %p145, %p146
      %p148 = scmp.ne.s32.totalorder %s137, %s140
      %p149 = scmp.eq.s32.totalorder %s23, 1
      %p150 = por %p148, %p149
      %p151 = scmp.ne.s32.totalorder %s140, %s141
      %p152 = scmp.eq.s32.totalorder %s23, 0
      %p153 = por %p151, %p152
      %p154 = scmp.ne.s32.totalorder %s140, %s141
      %p155 = scmp.eq.s32.totalorder %s24, 1
      %p156 = por %p154, %p155
      %p158 = scmp.ne.s32.totalorder %s141, %s157
      %p159 = scmp.eq.s32.totalorder %s24, 0
      %p160 = por %p158, %p159
      %p161 = scmp.le.s32.totalorder 1, %s18
      %p162 = scmp.lt.s32.totalorder %s18, 3
      %p163 = pnand %p161, %p162
      %p164 = pneg %p163
      // Predicated region
      $region9: #{tpu_custom_call.1} parent=5 // pred_check
        _
      $region10: #{tpu_custom_call.1} parent=5 // pred_check_branch
        %166 = sbr.rel (%p163) target = $region12
      $region11: #{tpu_custom_call.1} parent=5 // pred_region
        %s167 = ssub.s32 %s18, 1
      $region12: #{tpu_custom_call.1} parent=5 // pred_fallthru
        _
      %p168 = scmp.lt.s32.totalorder %s18, 2
      // Predicated region
      $region13: #{tpu_custom_call.1} parent=5 // pred_check
        %p169 = pneg %p168
      $region14: #{tpu_custom_call.1} parent=5 // pred_check_branch
        %171 = sbr.rel (%p169) target = $region16
      $region15: #{tpu_custom_call.1} parent=5 // pred_region
        // Predicated region
        $region17: #{tpu_custom_call.1} parent=15 // pred_check
          %p172 = pneg %p61
        $region18: #{tpu_custom_call.1} parent=15 // pred_check_branch
          %174 = sbr.rel (%p172) target = $region20
        $region19: #{tpu_custom_call.1} parent=15 // pred_region
          %s175 = sand.u32 %s51, 1
          %s176 = scalar_lea.sflag [#allocation3], %s175
          %s177 = sand.u32 %s51, 1
          %s178 = smul.addr %s177, 64
          %s179 = scalar_lea.vmem [#allocation2], %s178
          %s180 = smul.u32 4, %s27
          %s181 = smul.u32 2, %s26
          %183 = vsyncadd %s176, 0
          %s184 = smul.addr %s180, 2
          %s185 = sadd.s32 %s181, %s184
          %s186 = smul.addr %s25, 8
          %s187 = sadd.s32 %s185, %s186
          %s188 = smul.addr %s187, 8
          %s189 = scalar_lea.hbm %s0, %s188
          %s190 = sshll.u32 %s189, 4
          %s191 = int_to_ptr.hbm [resolvable:$true] %s190
          %s192 = sshll.u32 %s179, 4
          %s193 = int_to_ptr.vmem [resolvable:$true] %s192
          %198 = dma.hbm_to_vmem [thread:$0]  %s191, 1024, %s193, %s176, 128, 128, 8
        $region20: #{tpu_custom_call.1} parent=15 // pred_fallthru
          _
        // Predicated region
        $region21: #{tpu_custom_call.1} parent=15 // pred_check
          %p199 = pneg %p91
        $region22: #{tpu_custom_call.1} parent=15 // pred_check_branch
          %201 = sbr.rel (%p199) target = $region24
        $region23: #{tpu_custom_call.1} parent=15 // pred_region
          %s202 = sand.u32 %s18, 1
          %s203 = scalar_lea.sflag [#allocation6], %s202
          %s204 = sand.u32 %s81, 1
          %s205 = smul.addr %s204, 64
          %s206 = scalar_lea.vmem [#allocation5], %s205
          %s207 = smul.u32 4, %s27
          %s208 = smul.u32 2, %s26
          %210 = vsyncadd %s203, 0
          %s211 = smul.addr %s207, 2
          %s212 = sadd.s32 %s208, %s211
          %s213 = smul.addr %s25, 8
          %s214 = sadd.s32 %s212, %s213
          %s215 = smul.addr %s214, 8
          %s216 = scalar_lea.hbm %s1, %s215
          %s217 = sshll.u32 %s216, 4
          %s218 = int_to_ptr.hbm [resolvable:$true] %s217
          %s219 = sshll.u32 %s206, 4
          %s220 = int_to_ptr.vmem [resolvable:$true] %s219
          %225 = dma.hbm_to_vmem [thread:$0]  %s218, 1024, %s220, %s203, 128, 128, 8
        $region24: #{tpu_custom_call.1} parent=15 // pred_fallthru
          _
        // Predicated region
        $region25: #{tpu_custom_call.1} parent=15 // pred_check
          %p226 = pneg %p119
        $region26: #{tpu_custom_call.1} parent=15 // pred_check_branch
          %228 = sbr.rel (%p226) target = $region28
        $region27: #{tpu_custom_call.1} parent=15 // pred_region
          %s229 = sand.u32 %s18, 1
          %s230 = scalar_lea.sflag [#allocation6], %s229
          %s231 = sand.u32 %s109, 1
          %s232 = smul.addr %s231, 16
          %s233 = scalar_lea.vmem [#allocation7], %s232
          %s234 = smul.u32 2, %s26
          %236 = vsyncadd %s230, 0
          %s237 = smul.addr %s25, 2
          %s238 = sadd.s32 %s234, %s237
          %s239 = smul.addr %s238, 8
          %s240 = scalar_lea.hbm %s2, %s239
          %s241 = sshll.u32 %s240, 4
          %s242 = int_to_ptr.hbm [resolvable:$true] %s241
          %s243 = sshll.u32 %s233, 4
          %s244 = int_to_ptr.vmem [resolvable:$true] %s243
          %249 = dma.hbm_to_vmem [thread:$0]  %s242, 256, %s244, %s230, 128, 128, 8
        $region28: #{tpu_custom_call.1} parent=15 // pred_fallthru
          _
      $region16: #{tpu_custom_call.1} parent=5 // pred_fallthru
        _
      %p250 = scmp.le.s32.totalorder 1, %s18
      %p251 = scmp.lt.s32.totalorder %s18, 3
      %p252 = pnand %p250, %p251
      %p253 = pneg %p252
      // Predicated region
      $region29: #{tpu_custom_call.1} parent=5 // pred_check
        _
      $region30: #{tpu_custom_call.1} parent=5 // pred_check_branch
        %255 = sbr.rel (%p252) target = $region32
      $region31: #{tpu_custom_call.1} parent=5 // pred_region
        %s256 = ssub.s32 %s18, 1
        %s257 = sand.u32 %s54, 1
        %s258 = scalar_lea.sflag [#allocation3], %s257
        %s259 = sand.u32 %s54, 1
        %s260 = smul.addr %s259, 64
        %s261 = scalar_lea.vmem [#allocation2], %s260
        // Predicated region
        $region33: #{tpu_custom_call.1} parent=31 // pred_check
          %p262 = pneg %p67
        $region34: #{tpu_custom_call.1} parent=31 // pred_check_branch
          %264 = sbr.rel (%p262) target = $region36
        $region35: #{tpu_custom_call.1} parent=31 // pred_region
          %266 = dma.done %s258, 1024
        $region36: #{tpu_custom_call.1} parent=31 // pred_fallthru
          _
        %s267 = sand.u32 %s23, 1
        %s268 = scalar_lea.sflag [#allocation6], %s267
        %s269 = sand.u32 %s84, 1
        %s270 = smul.addr %s269, 64
        %s271 = scalar_lea.vmem [#allocation5], %s270
        // Predicated region
        $region37: #{tpu_custom_call.1} parent=31 // pred_check
          %p272 = pneg %p97
        $region38: #{tpu_custom_call.1} parent=31 // pred_check_branch
          %274 = sbr.rel (%p272) target = $region40
        $region39: #{tpu_custom_call.1} parent=31 // pred_region
          %276 = dma.done %s268, 1024
        $region40: #{tpu_custom_call.1} parent=31 // pred_fallthru
          _
        %s277 = sand.u32 %s23, 1
        %s278 = scalar_lea.sflag [#allocation6], %s277
        %s279 = sand.u32 %s112, 1
        %s280 = smul.addr %s279, 16
        %s281 = scalar_lea.vmem [#allocation7], %s280
        // Predicated region
        $region41: #{tpu_custom_call.1} parent=31 // pred_check
          %p282 = pneg %p125
        $region42: #{tpu_custom_call.1} parent=31 // pred_check_branch
          %284 = sbr.rel (%p282) target = $region44
        $region43: #{tpu_custom_call.1} parent=31 // pred_region
          %286 = dma.done %s278, 256
        $region44: #{tpu_custom_call.1} parent=31 // pred_fallthru
          _
        %s287 = sand.u32 %s54, 1
        %s288 = scalar_lea.sflag [#allocation3], %s287
        %s289 = sand.u32 %s54, 1
        %s290 = smul.addr %s289, 64
        %s291 = scalar_lea.vmem [#allocation2], %s290
        %p292 = pneg %p67
        %p293 = pneg %p64
        %s294 = sand.u32 %s23, 1
        %s295 = scalar_lea.sflag [#allocation6], %s294
        %s296 = sand.u32 %s84, 1
        %s297 = smul.addr %s296, 64
        %s298 = scalar_lea.vmem [#allocation5], %s297
        %p299 = pneg %p97
        %p300 = pneg %p94
        %s301 = sand.u32 %s23, 1
        %s302 = scalar_lea.sflag [#allocation6], %s301
        %s303 = sand.u32 %s112, 1
        %s304 = smul.addr %s303, 16
        %s305 = scalar_lea.vmem [#allocation7], %s304
        %p306 = pneg %p125
        %p307 = pneg %p122
        %p308 = pneg %p153
        %p309 = pneg %p150
        %s310 = sand.u32 %s140, 1
        %s311 = scalar_lea.sflag [#allocation4], %s310
        %s312 = sand.u32 %s140, 1
        %s313 = smul.addr %s312, 8
        %s314 = scalar_lea.vmem [#allocation8], %s313
        %s315 = smul.u32 4, %s30
        %s316 = smul.u32 2, %s29
        %s317 = smul.u32 4, %s30
        %s318 = smul.u32 2, %s29
        %s319 = smul.u32 2, %s29
        %v320 = vld [vmem:[%s261] sm:$0xff]
        %v321 = vld [vmem:[%s261 + $0x8] sm:$0xff]
        %v322 = vld [vmem:[%s261 + $0x10] sm:$0xff]
        %v323 = vld [vmem:[%s261 + $0x18] sm:$0xff]
        %v324 = vld [vmem:[%s261 + $0x20] sm:$0xff]
        %v325 = vld [vmem:[%s261 + $0x28] sm:$0xff]
        %v326 = vld [vmem:[%s261 + $0x30] sm:$0xff]
        %v327 = vld [vmem:[%s261 + $0x38] sm:$0xff]
        %v328 = vld [vmem:[%s271] sm:$0xff]
        %v329 = vld [vmem:[%s271 + $0x8] sm:$0xff]
        %v330 = vld [vmem:[%s271 + $0x10] sm:$0xff]
        %v331 = vld [vmem:[%s271 + $0x18] sm:$0xff]
        %v332 = vld [vmem:[%s271 + $0x20] sm:$0xff]
        %v333 = vld [vmem:[%s271 + $0x28] sm:$0xff]
        %v334 = vld [vmem:[%s271 + $0x30] sm:$0xff]
        %v335 = vld [vmem:[%s271 + $0x38] sm:$0xff]
        %v336 = vsub.f32 %v320, %v328
        %v337 = vsub.f32 %v321, %v329
        %v338 = vsub.f32 %v322, %v330
        %v339 = vsub.f32 %v323, %v331
        %v340 = vsub.f32 %v324, %v332
        %v341 = vsub.f32 %v325, %v333
        %v342 = vsub.f32 %v326, %v334
        %v343 = vsub.f32 %v327, %v335
        %v344 = vmul.f32 %v336, %v336
        %v345 = vmul.f32 %v337, %v337
        %v346 = vmul.f32 %v338, %v338
        %v347 = vmul.f32 %v339, %v339
        %v348 = vmul.f32 %v340, %v340
        %v349 = vmul.f32 %v341, %v341
        %v350 = vmul.f32 %v342, %v342
        %v351 = vmul.f32 %v343, %v343
        %vm352 = vcmask 130048
        %v353 = vsel %vm352, %v344, 0.0
        %v354 = vsel %vm352, %v346, 0.0
        %v355 = vadd.f32 %v353, %v354
        %v356 = vsel %vm352, %v348, 0.0
        %v357 = vadd.f32 %v355, %v356
        %v358 = vsel %vm352, %v350, 0.0
        %v359 = vadd.f32 %v357, %v358
        %v360 = vsel %vm352, %v345, 0.0
        %v361 = vsel %vm352, %v347, 0.0
        %v362 = vadd.f32 %v360, %v361
        %v363 = vsel %vm352, %v349, 0.0
        %v364 = vadd.f32 %v362, %v363
        %v365 = vsel %vm352, %v351, 0.0
        %v366 = vadd.f32 %v364, %v365
        %v367 = vld [vmem:[%s281] sm:$0xff]
        %v368 = vld [vmem:[%s281 + $0x8] sm:$0xff]
        %v369 = vadd.f32 %v367, 1.0
        %v370 = vadd.f32 %v368, 1.0
        %v371 = vmul.f32 %v369, 0.5
        %v372 = vmul.f32 %v370, 0.5
        %v373 = vmul.f32 %v359, %v371
        %v374 = vmul.f32 %v366, %v372
        %v375 = vsel %vm352, %v373, 0.0
        %v376 = vsel %vm352, %v374, 0.0
        %v377 = vadd.f32 %v375, %v376
        %378 = vst.msk [vmem:[%s314] sm:$0xff] %vm352, %v377
        %s379 = sand.u32 %s140, 1
        %s380 = scalar_lea.sflag [#allocation4], %s379
        %s381 = sand.u32 %s140, 1
        %s382 = smul.addr %s381, 8
        %s383 = scalar_lea.vmem [#allocation8], %s382
        // Predicated region
        $region45: #{tpu_custom_call.1} parent=31 // pred_check
          %p384 = pneg %p150
        $region46: #{tpu_custom_call.1} parent=31 // pred_check_branch
          %386 = sbr.rel (%p384) target = $region48
        $region47: #{tpu_custom_call.1} parent=31 // pred_region
          %388 = vsyncadd %s380, 0
          %s389 = sadd.s32 %s29, %s28
          %s390 = smul.addr %s389, 8
          %s391 = scalar_lea.hbm %s3, %s390
          %s393 = sshll.u32 %s383, 4
          %s394 = int_to_ptr.vmem [resolvable:$true] %s393
          %s395 = sshll.u32 %s391, 4
          %s396 = int_to_ptr.hbm [resolvable:$true] %s395
          %398 = dma.vmem_to_hbm [thread:$0]  %s394, 128, %s396, %s380
        $region48: #{tpu_custom_call.1} parent=31 // pred_fallthru
          _
      $region32: #{tpu_custom_call.1} parent=5 // pred_fallthru
        _
      %p399 = scmp.le.s32.totalorder 2, %s18
      // Predicated region
      $region49: #{tpu_custom_call.1} parent=5 // pred_check
        %p400 = pneg %p399
      $region50: #{tpu_custom_call.1} parent=5 // pred_check_branch
        %402 = sbr.rel (%p400) target = $region52
      $region51: #{tpu_custom_call.1} parent=5 // pred_region
        %s403 = ssub.s32 %s18, 2
        // Predicated region
        $region53: #{tpu_custom_call.1} parent=51 // pred_check
          %p404 = pneg %p156
        $region54: #{tpu_custom_call.1} parent=51 // pred_check_branch
          %406 = sbr.rel (%p404) target = $region56
        $region55: #{tpu_custom_call.1} parent=51 // pred_region
          %s407 = sand.u32 %s141, 1
          %s408 = scalar_lea.sflag [#allocation4], %s407
          %s409 = sand.u32 %s141, 1
          %s410 = smul.addr %s409, 8
          %s411 = scalar_lea.vmem [#allocation8], %s410
          %413 = dma.done %s408, 128
        $region56: #{tpu_custom_call.1} parent=51 // pred_fallthru
          _
      $region52: #{tpu_custom_call.1} parent=5 // pred_fallthru
        _
    $region6: #{tpu_custom_call.1} parent=1 // loop_footer
      %s22 = sadd.s32 1, %s18
    $region7: #{tpu_custom_call.1} parent=1 // loop_footer_branch
      %17 = sbr.rel target = $region3
    $region8: #{tpu_custom_call.1} parent=1 // loop_exit
      _
    %414 = vsyncpa [#allocation3], 1
    %s415 = scalar_lea.sflag [#allocation3], 1
    %416 = vsyncpa %s415, 1
    %417 = vsyncpa [#allocation6], 1
    %s418 = scalar_lea.sflag [#allocation6], 1
    %419 = vsyncpa %s418, 1
    %420 = vsyncpa [#allocation4], 1
    %s421 = scalar_lea.sflag [#allocation4], 1
    %422 = vsyncpa %s421, 1

</llo_original>
